<compile_context>
chip_gen: v6e
topology: v6e:2x2x1
jax: 0.10.0
libtpu: 0.0.40
codegen_flags: <defaults>
</compile_context>

<pallas_src>
import functools

import jax
import jax.numpy as jnp
from jax.experimental import pallas as pl
from jax.experimental.pallas import tpu as pltpu

EPS = 1e-8
R_CUT = 4.8
PRIOR_PRE = 1.0        # prior_net_config['pre_factor']
PRIOR_N = 12           # prior_net_config['n']
HID = 32               # hidden_dim = [32, 32], n_layers = 1 (both nets)
IN_PRIOR = 15
IN_ENERGY = 16
XCOLS = 32             # padded feature lanes: [1/R, f15(15), R, 0...]
HC = 2 * HID           # fused hidden width (prior | energy)
ROW_TILE = 512         # rows per grid step (B*Nb rows are flattened)


def _ipow(x, n):
    """x**n for a positive python-int n via explicit multiplies (Mosaic-safe)."""
    acc = None
    while n > 0:
        if n & 1:
            acc = x if acc is None else acc * x
        x = x * x
        n >>= 1
    return acc


def _fused_mlp_grad_kernel(x_ref, w0_ref, w1_ref, w2_ref, w0t_ref, w1t_ref,
                           aux_ref, out_ref):
    x = x_ref[...]                                   # (RT, 32) f32
    rt = x.shape[0]

    inv_r = x[:, 0:1]                                # 1/R
    r_col = x[:, 16:17]                              # R (multiplied by zero W0 rows)

    b0 = aux_ref[0:1, :]                             # (1, 64)
    b1 = aux_ref[1:2, :]                             # (1, 64)
    b2 = aux_ref[2:3, 0:8]                           # (1, 8)
    w2p_row = aux_ref[3:4, :]                        # (1, 64) == W2c[:, 0]^T
    w2e_row = aux_ref[4:5, :]                        # (1, 64) == W2c[:, 1]^T

    # ---- fused forward: [prior | energy] block-diagonal MLP -----------------
    h1 = jnp.tanh(jnp.dot(x, w0_ref[...], preferred_element_type=jnp.float32) + b0)
    h2 = jnp.tanh(jnp.dot(h1, w1_ref[...], preferred_element_type=jnp.float32) + b1)
    y = jnp.dot(h2, w2_ref[...], preferred_element_type=jnp.float32) + b2   # (RT, 8)
    a_p = jnp.tanh(y[:, 0:1])     # prior_enc   = tanh(prior_net(f15))
    b_e = jnp.tanh(y[:, 1:2])     # sym_encode  = tanh(energy_net([1/R, f15]))

    # ---- radial envelopes and their dR derivatives --------------------------
    rr = r_col * (1.0 / R_CUT)
    rr_pm1 = _ipow(rr, PRIOR_N - 1)
    g = PRIOR_PRE * jnp.exp(-(rr_pm1 * rr))                  # pre*exp(-(R/Rc)^n)
    gp = -g * (PRIOR_N / R_CUT) * rr_pm1                     # dg/dR
    in_cut = r_col <= R_CUT
    fc = jnp.where(in_cut, 0.5 * jnp.cos(jnp.pi * rr) + 0.5, 0.0)
    fcp = jnp.where(in_cut, (-0.5 * jnp.pi / R_CUT) * jnp.sin(jnp.pi * rr), 0.0)

    e_row = g * a_p + fc * b_e                               # per-neighbor energy

    # ---- analytic backward (manual VJP) with cotangent [g(1-A^2), fc(1-B^2)] -
    cp = g * (1.0 - a_p * a_p)
    ce = fc * (1.0 - b_e * b_e)
    dh2 = cp * w2p_row + ce * w2e_row                        # (RT, 64)
    dz1 = dh2 * (1.0 - h2 * h2)
    dh1 = jnp.dot(dz1, w1t_ref[...], preferred_element_type=jnp.float32)
    dz0 = dh1 * (1.0 - h1 * h1)
    d_x = jnp.dot(dz0, w0t_ref[...], preferred_element_type=jnp.float32)  # (RT, 32)
    # d_x[:, 0]    = dE/d(1/R)
    # d_x[:, 1:16] = dE/d(f15)   (already scaled by g(1-A^2)/fc(1-B^2))
    # d_x[:, 16:]  = 0

    # Radial part of dE/d(dr) collapses onto the unit vector u:
    #   grad_r = cR * u + (O @ g_do + M @ g_dn) / R
    prod = d_x * x
    dot_uf = (prod[:, 1:2] + prod[:, 2:3] + prod[:, 3:4]     # g_do.f_do + g_dn.f_dn
              + prod[:, 4:5] + prod[:, 5:6] + prod[:, 6:7])
    c_r = gp * a_p + fcp * b_e - d_x[:, 0:1] * inv_r * inv_r - dot_uf * inv_r

    # ---- single lane-dense packed output: d_x with e_row / cR in spare lanes -
    lane = jax.lax.broadcasted_iota(jnp.int32, (rt, XCOLS), 1)
    out = jnp.where(lane == 16, e_row, jnp.where(lane == 17, c_r, d_x))
    out_ref[...] = out


def _round_up(x, m):
    return (x + m - 1) // m * m


def _pack_fused_weights(params):
    """Pack the two 3-layer MLPs into one block-diagonal network (6 streams)."""
    w0p, b0p, w1p, b1p, w2p, b2p = params['prior']
    w0e, b0e, w1e, b1e, w2e, b2e = params['energy']
    f32 = jnp.float32

    w0c = jnp.zeros((XCOLS, HC), f32)
    w0c = w0c.at[1:1 + IN_PRIOR, :HID].set(w0p.astype(f32))   # prior reads f15 (cols 1..15)
    w0c = w0c.at[:IN_ENERGY, HID:].set(w0e.astype(f32))       # energy reads [1/R, f15]

    w1c = jnp.zeros((HC, HC), f32)
    w1c = w1c.at[:HID, :HID].set(w1p.astype(f32))
    w1c = w1c.at[HID:, HID:].set(w1e.astype(f32))

    w2c = jnp.zeros((HC, 8), f32)
    w2c = w2c.at[:HID, 0].set(w2p[:, 0].astype(f32))
    w2c = w2c.at[HID:, 1].set(w2e[:, 0].astype(f32))

    aux = jnp.zeros((8, HC), f32)
    aux = aux.at[0, :HID].set(b0p.astype(f32)).at[0, HID:].set(b0e.astype(f32))
    aux = aux.at[1, :HID].set(b1p.astype(f32)).at[1, HID:].set(b1e.astype(f32))
    aux = aux.at[2, 0].set(b2p[0].astype(f32)).at[2, 1].set(b2e[0].astype(f32))
    aux = aux.at[3, :].set(w2c[:, 0])                         # rows used by the backward
    aux = aux.at[4, :].set(w2c[:, 1])

    return w0c, w1c, w2c, w0c.T, w1c.T, aux


def particle_energy_predictor(dr, orientation, n_orientation, params):
    """Forward pass of ParticleEnergyPredictor_V2 -> (force, torque, energy)."""
    B, Nb, _ = dr.shape
    f32 = jnp.float32
    dr = dr.astype(f32)
    o_mat = orientation.astype(f32)        # (B, 3, 3)
    m_mat = n_orientation.astype(f32)      # (B, Nb, 3, 3)

    # ---- geometry / feature construction (plain-JAX glue) -------------------
    r = dr + EPS                                             # matches torch: dr + eps
    rad = jnp.sqrt(jnp.sum(r * r, axis=-1, keepdims=True))   # (B, Nb, 1)
    u = r / rad                                              # dr_norm
    f_do = jnp.einsum('bni,bik->bnk', u, o_mat)              # (B, Nb, 3)
    f_dn = jnp.einsum('bni,bnik->bnk', u, m_mat)             # (B, Nb, 3)
    f_oo = jnp.einsum('bij,bnik->bnjk', o_mat, m_mat).reshape(B, Nb, 9)
    inv_r = 1.0 / rad
    x = jnp.concatenate(
        [inv_r, f_do, f_dn, f_oo, rad, jnp.zeros((B, Nb, XCOLS - 17), f32)],
        axis=-1)                                             # (B, Nb, 32)

    rows = B * Nb
    rt = min(ROW_TILE, _round_up(rows, 8))
    rows_pad = _round_up(rows, rt)
    xr = x.reshape(rows, XCOLS)
    if rows_pad != rows:
        xr = jnp.pad(xr, ((0, rows_pad - rows), (0, 0)))

    w0c, w1c, w2c, w0t, w1t, aux = _pack_fused_weights(params)

    def const_spec(arr):
        return pl.BlockSpec(arr.shape, lambda i: (0, 0))

    grid_spec = pltpu.PrefetchScalarGridSpec(
        num_scalar_prefetch=0,
        grid=(rows_pad // rt,),
        in_specs=[pl.BlockSpec((rt, XCOLS), lambda i: (i, 0))]
                 + [const_spec(w) for w in (w0c, w1c, w2c, w0t, w1t, aux)],
        out_specs=pl.BlockSpec((rt, XCOLS), lambda i: (i, 0)),
    )

    out = pl.pallas_call(
        _fused_mlp_grad_kernel,
        grid_spec=grid_spec,
        out_shape=jax.ShapeDtypeStruct((rows_pad, XCOLS), f32),
        compiler_params=pltpu.CompilerParams(
            dimension_semantics=("parallel",)),
    )(xr, w0c, w1c, w2c, w0t, w1t, aux)

    out = out[:rows].reshape(B, Nb, XCOLS)
    g_do = out[..., 1:4]                         # dE/d(f_do)
    g_dn = out[..., 4:7]                         # dE/d(f_dn)
    g_oo = out[..., 7:16].reshape(B, Nb, 3, 3)   # dE/d(f_oo)   [j, k]
    e_row = out[..., 16:17]                      # per-neighbor energy
    c_r = out[..., 17:18]                        # radial force coefficient

    predicted_energy = jnp.sum(e_row, axis=1)                              # (B, 1)

    # dE/d(dr): grad_r = cR * u + (O @ g_do + M @ g_dn) / R   (raw grad, as in torch)
    grad_r = c_r * u + (jnp.einsum('bik,bnk->bni', o_mat, g_do)
                        + jnp.einsum('bnik,bnk->bni', m_mat, g_dn)) / rad
    predicted_force = jnp.sum(grad_r, axis=1)                              # (B, 3)

    # dE/d(orientation): sum_n [ u_i g_do_j + sum_k g_oo[j,k] M[i,k] ]
    grad_o = (jnp.einsum('bni,bnj->bij', u, g_do)
              + jnp.einsum('bnjk,bnik->bij', g_oo, m_mat))                 # (B, 3, 3)
    predicted_torque = (jnp.cross(grad_o[:, :, 0], o_mat[:, :, 0])
                        + jnp.cross(grad_o[:, :, 1], o_mat[:, :, 1])
                        + jnp.cross(grad_o[:, :, 2], o_mat[:, :, 2]))      # (B, 3)

    return predicted_force, predicted_torque, predicted_energy


# ----------------------- pure-JAX reference (for checking) -------------------
def _mlp_ref(xx, p):
    w0, b0, w1, b1, w2, b2 = p
    h = jnp.tanh(xx @ w0 + b0)
    h = jnp.tanh(h @ w1 + b1)
    return h @ w2 + b2


def _energy_ref(dr, o_mat, m_mat, params):
    B, Nb, _ = dr.shape
    r = dr + EPS
    rad = jnp.sqrt(jnp.sum(r * r, axis=-1, keepdims=True))
    u = r / rad
    f_do = jnp.einsum('bni,bik->bnk', u, o_mat)
    f_dn = jnp.einsum('bni,bnik->bnk', u, m_mat)
    f_oo = jnp.einsum('bij,bnik->bnjk', o_mat, m_mat).reshape(B, Nb, 9)
    f15 = jnp.concatenate([f_do, f_dn, f_oo], axis=-1)
    prior_enc = jnp.tanh(_mlp_ref(f15, params['prior']))
    prior_out = PRIOR_PRE * jnp.exp(-(rad / R_CUT) ** PRIOR_N) * prior_enc
    fc_r = jnp.where(rad > R_CUT, 0.0, 0.5 * jnp.cos(jnp.pi * rad / R_CUT) + 0.5)
    sym = jnp.tanh(_mlp_ref(jnp.concatenate([1.0 / rad, f15], axis=-1),
                            params['energy']))
    return jnp.sum(sym * fc_r + prior_out, axis=1)            # (B, 1)


def _reference(dr, o_mat, m_mat, params):
    energy = _energy_ref(dr, o_mat, m_mat, params)
    g_dr, g_o = jax.grad(
        lambda d, o: jnp.sum(_energy_ref(d, o, m_mat, params)),
        argnums=(0, 1))(dr, o_mat)
    force = jnp.sum(g_dr, axis=1)
    torque = (jnp.cross(g_o[:, :, 0], o_mat[:, :, 0])
              + jnp.cross(g_o[:, :, 1], o_mat[:, :, 1])
              + jnp.cross(g_o[:, :, 2], o_mat[:, :, 2]))
    return force, torque, energy


def init_mlp_params(key, in_dim, hid, out_dim):
    ks = jax.random.split(key, 6)
    s0 = 1.0 / (in_dim ** 0.5)
    s1 = 1.0 / (hid ** 0.5)
    w0 = jax.random.uniform(ks[0], (in_dim, hid), jnp.float32, -s0, s0)
    b0 = jax.random.uniform(ks[1], (hid,), jnp.float32, -s0, s0)
    w1 = jax.random.uniform(ks[2], (hid, hid), jnp.float32, -s1, s1)
    b1 = jax.random.uniform(ks[3], (hid,), jnp.float32, -s1, s1)
    w2 = jax.random.uniform(ks[4], (hid, out_dim), jnp.float32, -s1, s1)
    b2 = jax.random.uniform(ks[5], (out_dim,), jnp.float32, -s1, s1)
    return (w0, b0, w1, b1, w2, b2)


if __name__ == "__main__":
    key = jax.random.PRNGKey(0)
    k_dr, k_ori, k_nori, k_p, k_e = jax.random.split(key, 5)

    B, Nb = 2, 8
    dr = jax.random.normal(k_dr, (B, Nb, 3), jnp.float32) * 2.0
    orientation = jax.random.normal(k_ori, (B, 3, 3), jnp.float32)
    n_orientation = jax.random.normal(k_nori, (B, Nb, 3, 3), jnp.float32)

    params = {
        'prior': init_mlp_params(k_p, IN_PRIOR, HID, 1),
        'energy': init_mlp_params(k_e, IN_ENERGY, HID, 1),
    }

    fwd = jax.jit(functools.partial(particle_energy_predictor, params=params))
    force, torque, energy = fwd(dr, orientation, n_orientation)
    jax.block_until_ready((force, torque, energy))

    assert force.shape == (B, 3)
    assert torque.shape == (B, 3)
    assert energy.shape == (B, 1)

    # Check against a pure-JAX reference that mirrors the torch.autograd.grad
    # calls in forward() with jax.grad.
    f_ref, t_ref, e_ref = _reference(dr, orientation, n_orientation, params)

    def _close(a, b, tol=2e-3):
        a = jnp.asarray(a)
        b = jnp.asarray(b)
        scale = jnp.maximum(jnp.max(jnp.abs(b)), 1.0)
        return float(jnp.max(jnp.abs(a - b))) <= tol * float(scale)

    assert _close(energy, e_ref)
    assert _close(force, f_ref)
    assert _close(torque, t_ref)

    print("KERNEL_OK")
</pallas_src>

<mosaic_0001>
module attributes {stable_mosaic.version = 11 : i64} {
  func.func @_fused_mlp_grad_kernel(%arg0: i32, %arg1: memref<16x32xf32, #tpu.memory_space<vmem>>, %arg2: memref<32x64xf32, #tpu.memory_space<vmem>>, %arg3: memref<64x64xf32, #tpu.memory_space<vmem>>, %arg4: memref<64x8xf32, #tpu.memory_space<vmem>>, %arg5: memref<64x32xf32, #tpu.memory_space<vmem>>, %arg6: memref<64x64xf32, #tpu.memory_space<vmem>>, %arg7: memref<8x64xf32, #tpu.memory_space<vmem>>, %arg8: memref<16x32xf32, #tpu.memory_space<vmem>>) attributes {dimension_semantics = [#tpu.dimension_semantics<parallel>], iteration_bounds = array<i64: 1>, scalar_prefetch = 0 : i64, scratch_operands = 0 : i64, tpu.core_type = #tpu.core_type<tc>, window_params = [{transform_indices = @transform_0, window_bounds = array<i64: 16, 32>}, {pipeline_mode = #tpu.pipeline_mode<synchronous>, transform_indices = @transform_1, window_bounds = array<i64: 32, 64>}, {pipeline_mode = #tpu.pipeline_mode<synchronous>, transform_indices = @transform_2, window_bounds = array<i64: 64, 64>}, {pipeline_mode = #tpu.pipeline_mode<synchronous>, transform_indices = @transform_3, window_bounds = array<i64: 64, 8>}, {pipeline_mode = #tpu.pipeline_mode<synchronous>, transform_indices = @transform_4, window_bounds = array<i64: 64, 32>}, {pipeline_mode = #tpu.pipeline_mode<synchronous>, transform_indices = @transform_5, window_bounds = array<i64: 64, 64>}, {pipeline_mode = #tpu.pipeline_mode<synchronous>, transform_indices = @transform_6, window_bounds = array<i64: 8, 64>}, {transform_indices = @transform_7, window_bounds = array<i64: 16, 32>}]} {
    %c0 = arith.constant 0 : index
    %c0_0 = arith.constant 0 : index
    %0 = vector.load %arg1[%c0, %c0_0] : memref<16x32xf32, #tpu.memory_space<vmem>>, vector<16x32xf32>
    %1 = vector.extract_strided_slice %0 {offsets = [0, 0], sizes = [16, 1], strides = [1, 1]} : vector<16x32xf32> to vector<16x1xf32>
    %2 = vector.extract_strided_slice %0 {offsets = [0, 16], sizes = [16, 1], strides = [1, 1]} : vector<16x32xf32> to vector<16x1xf32>
    %c0_1 = arith.constant 0 : index
    %c0_2 = arith.constant 0 : index
    %3 = vector.load %arg7[%c0_1, %c0_2] : memref<8x64xf32, #tpu.memory_space<vmem>>, vector<1x64xf32>
    %c1 = arith.constant 1 : index
    %c0_3 = arith.constant 0 : index
    %4 = vector.load %arg7[%c1, %c0_3] : memref<8x64xf32, #tpu.memory_space<vmem>>, vector<1x64xf32>
    %c2 = arith.constant 2 : index
    %c0_4 = arith.constant 0 : index
    %5 = vector.load %arg7[%c2, %c0_4] : memref<8x64xf32, #tpu.memory_space<vmem>>, vector<1x8xf32>
    %c3 = arith.constant 3 : index
    %c0_5 = arith.constant 0 : index
    %6 = vector.load %arg7[%c3, %c0_5] : memref<8x64xf32, #tpu.memory_space<vmem>>, vector<1x64xf32>
    %c4 = arith.constant 4 : index
    %c0_6 = arith.constant 0 : index
    %7 = vector.load %arg7[%c4, %c0_6] : memref<8x64xf32, #tpu.memory_space<vmem>>, vector<1x64xf32>
    %c0_7 = arith.constant 0 : index
    %c0_8 = arith.constant 0 : index
    %8 = vector.load %arg2[%c0_7, %c0_8] : memref<32x64xf32, #tpu.memory_space<vmem>>, vector<32x64xf32>
    %cst = arith.constant dense<0.000000e+00> : vector<16x64xf32>
    %9 = tpu.matmul %0, %8, %cst {dimension_numbers = #tpu.dot_dimension_numbers<[1], [0], [0], [1], [0, 0, 1, 1], [], []>} : vector<16x32xf32>, vector<32x64xf32>, vector<16x64xf32> -> vector<16x64xf32>
    %10 = vector.broadcast %3 : vector<1x64xf32> to vector<16x64xf32>
    %11 = arith.addf %9, %10 : vector<16x64xf32>
    %12 = math.tanh %11 : vector<16x64xf32>
    %c0_9 = arith.constant 0 : index
    %c0_10 = arith.constant 0 : index
    %13 = vector.load %arg3[%c0_9, %c0_10] : memref<64x64xf32, #tpu.memory_space<vmem>>, vector<64x64xf32>
    %cst_11 = arith.constant dense<0.000000e+00> : vector<16x64xf32>
    %14 = tpu.matmul %12, %13, %cst_11 {dimension_numbers = #tpu.dot_dimension_numbers<[1], [0], [0], [1], [0, 0, 1, 1], [], []>} : vector<16x64xf32>, vector<64x64xf32>, vector<16x64xf32> -> vector<16x64xf32>
    %15 = vector.broadcast %4 : vector<1x64xf32> to vector<16x64xf32>
    %16 = arith.addf %14, %15 : vector<16x64xf32>
    %17 = math.tanh %16 : vector<16x64xf32>
    %c0_12 = arith.constant 0 : index
    %c0_13 = arith.constant 0 : index
    %18 = vector.load %arg4[%c0_12, %c0_13] : memref<64x8xf32, #tpu.memory_space<vmem>>, vector<64x8xf32>
    %cst_14 = arith.constant dense<0.000000e+00> : vector<16x8xf32>
    %19 = tpu.matmul %17, %18, %cst_14 {dimension_numbers = #tpu.dot_dimension_numbers<[1], [0], [0], [1], [0, 0, 1, 1], [], []>} : vector<16x64xf32>, vector<64x8xf32>, vector<16x8xf32> -> vector<16x8xf32>
    %20 = vector.broadcast %5 : vector<1x8xf32> to vector<16x8xf32>
    %21 = arith.addf %19, %20 : vector<16x8xf32>
    %22 = vector.extract_strided_slice %21 {offsets = [0, 0], sizes = [16, 1], strides = [1, 1]} : vector<16x8xf32> to vector<16x1xf32>
    %23 = math.tanh %22 : vector<16x1xf32>
    %24 = vector.extract_strided_slice %21 {offsets = [0, 1], sizes = [16, 1], strides = [1, 1]} : vector<16x8xf32> to vector<16x1xf32>
    %25 = math.tanh %24 : vector<16x1xf32>
    %cst_15 = arith.constant 0.208333328 : f32
    %26 = vector.broadcast %cst_15 : f32 to vector<16x1xf32>
    %27 = arith.mulf %2, %26 : vector<16x1xf32>
    %28 = arith.mulf %27, %27 : vector<16x1xf32>
    %29 = arith.mulf %27, %28 : vector<16x1xf32>
    %30 = arith.mulf %28, %28 : vector<16x1xf32>
    %31 = arith.mulf %30, %30 : vector<16x1xf32>
    %32 = arith.mulf %29, %31 : vector<16x1xf32>
    %33 = arith.mulf %32, %27 : vector<16x1xf32>
    %cst_16 = arith.constant 0.000000e+00 : f32
    %34 = vector.broadcast %cst_16 : f32 to vector<16x1xf32>
    %35 = arith.subf %34, %33 : vector<16x1xf32>
    %36 = math.exp %35 : vector<16x1xf32>
    %cst_17 = arith.constant 1.000000e+00 : f32
    %37 = vector.broadcast %cst_17 : f32 to vector<16x1xf32>
    %38 = arith.mulf %37, %36 : vector<16x1xf32>
    %cst_18 = arith.constant 0.000000e+00 : f32
    %39 = vector.broadcast %cst_18 : f32 to vector<16x1xf32>
    %40 = arith.subf %39, %38 : vector<16x1xf32>
    %cst_19 = arith.constant 2.500000e+00 : f32
    %41 = vector.broadcast %cst_19 : f32 to vector<16x1xf32>
    %42 = arith.mulf %40, %41 : vector<16x1xf32>
    %43 = arith.mulf %42, %32 : vector<16x1xf32>
    %cst_20 = arith.constant 4.800000e+00 : f32
    %44 = vector.broadcast %cst_20 : f32 to vector<16x1xf32>
    %45 = arith.cmpf ole, %2, %44 : vector<16x1xf32>
    %cst_21 = arith.constant 3.14159274 : f32
    %46 = vector.broadcast %cst_21 : f32 to vector<16x1xf32>
    %47 = arith.mulf %46, %27 : vector<16x1xf32>
    %48 = math.cos %47 : vector<16x1xf32>
    %cst_22 = arith.constant 5.000000e-01 : f32
    %49 = vector.broadcast %cst_22 : f32 to vector<16x1xf32>
    %50 = arith.mulf %49, %48 : vector<16x1xf32>
    %cst_23 = arith.constant 5.000000e-01 : f32
    %51 = vector.broadcast %cst_23 : f32 to vector<16x1xf32>
    %52 = arith.addf %50, %51 : vector<16x1xf32>
    %cst_24 = arith.constant 0.000000e+00 : f32
    %53 = vector.broadcast %cst_24 : f32 to vector<16x1xf32>
    %54 = arith.select %45, %52, %53 : vector<16x1xi1>, vector<16x1xf32>
    %cst_25 = arith.constant 3.14159274 : f32
    %55 = vector.broadcast %cst_25 : f32 to vector<16x1xf32>
    %56 = arith.mulf %55, %27 : vector<16x1xf32>
    %57 = math.sin %56 : vector<16x1xf32>
    %cst_26 = arith.constant -0.327249229 : f32
    %58 = vector.broadcast %cst_26 : f32 to vector<16x1xf32>
    %59 = arith.mulf %58, %57 : vector<16x1xf32>
    %cst_27 = arith.constant 0.000000e+00 : f32
    %60 = vector.broadcast %cst_27 : f32 to vector<16x1xf32>
    %61 = arith.select %45, %59, %60 : vector<16x1xi1>, vector<16x1xf32>
    %62 = arith.mulf %38, %23 : vector<16x1xf32>
    %63 = arith.mulf %54, %25 : vector<16x1xf32>
    %64 = arith.addf %62, %63 : vector<16x1xf32>
    %65 = arith.mulf %23, %23 : vector<16x1xf32>
    %cst_28 = arith.constant 1.000000e+00 : f32
    %66 = vector.broadcast %cst_28 : f32 to vector<16x1xf32>
    %67 = arith.subf %66, %65 : vector<16x1xf32>
    %68 = arith.mulf %38, %67 : vector<16x1xf32>
    %69 = arith.mulf %25, %25 : vector<16x1xf32>
    %cst_29 = arith.constant 1.000000e+00 : f32
    %70 = vector.broadcast %cst_29 : f32 to vector<16x1xf32>
    %71 = arith.subf %70, %69 : vector<16x1xf32>
    %72 = arith.mulf %54, %71 : vector<16x1xf32>
    %73 = vector.broadcast %68 : vector<16x1xf32> to vector<16x64xf32>
    %74 = vector.broadcast %6 : vector<1x64xf32> to vector<16x64xf32>
    %75 = arith.mulf %73, %74 : vector<16x64xf32>
    %76 = vector.broadcast %72 : vector<16x1xf32> to vector<16x64xf32>
    %77 = vector.broadcast %7 : vector<1x64xf32> to vector<16x64xf32>
    %78 = arith.mulf %76, %77 : vector<16x64xf32>
    %79 = arith.addf %75, %78 : vector<16x64xf32>
    %80 = arith.mulf %17, %17 : vector<16x64xf32>
    %cst_30 = arith.constant 1.000000e+00 : f32
    %81 = vector.broadcast %cst_30 : f32 to vector<16x64xf32>
    %82 = arith.subf %81, %80 : vector<16x64xf32>
    %83 = arith.mulf %79, %82 : vector<16x64xf32>
    %c0_31 = arith.constant 0 : index
    %c0_32 = arith.constant 0 : index
    %84 = vector.load %arg6[%c0_31, %c0_32] : memref<64x64xf32, #tpu.memory_space<vmem>>, vector<64x64xf32>
    %cst_33 = arith.constant dense<0.000000e+00> : vector<16x64xf32>
    %85 = tpu.matmul %83, %84, %cst_33 {dimension_numbers = #tpu.dot_dimension_numbers<[1], [0], [0], [1], [0, 0, 1, 1], [], []>} : vector<16x64xf32>, vector<64x64xf32>, vector<16x64xf32> -> vector<16x64xf32>
    %86 = arith.mulf %12, %12 : vector<16x64xf32>
    %cst_34 = arith.constant 1.000000e+00 : f32
    %87 = vector.broadcast %cst_34 : f32 to vector<16x64xf32>
    %88 = arith.subf %87, %86 : vector<16x64xf32>
    %89 = arith.mulf %85, %88 : vector<16x64xf32>
    %c0_35 = arith.constant 0 : index
    %c0_36 = arith.constant 0 : index
    %90 = vector.load %arg5[%c0_35, %c0_36] : memref<64x32xf32, #tpu.memory_space<vmem>>, vector<64x32xf32>
    %cst_37 = arith.constant dense<0.000000e+00> : vector<16x32xf32>
    %91 = tpu.matmul %89, %90, %cst_37 {dimension_numbers = #tpu.dot_dimension_numbers<[1], [0], [0], [1], [0, 0, 1, 1], [], []>} : vector<16x64xf32>, vector<64x32xf32>, vector<16x32xf32> -> vector<16x32xf32>
    %92 = arith.mulf %91, %0 : vector<16x32xf32>
    %93 = vector.extract_strided_slice %92 {offsets = [0, 1], sizes = [16, 1], strides = [1, 1]} : vector<16x32xf32> to vector<16x1xf32>
    %94 = vector.extract_strided_slice %92 {offsets = [0, 2], sizes = [16, 1], strides = [1, 1]} : vector<16x32xf32> to vector<16x1xf32>
    %95 = arith.addf %93, %94 : vector<16x1xf32>
    %96 = vector.extract_strided_slice %92 {offsets = [0, 3], sizes = [16, 1], strides = [1, 1]} : vector<16x32xf32> to vector<16x1xf32>
    %97 = arith.addf %95, %96 : vector<16x1xf32>
    %98 = vector.extract_strided_slice %92 {offsets = [0, 4], sizes = [16, 1], strides = [1, 1]} : vector<16x32xf32> to vector<16x1xf32>
    %99 = arith.addf %97, %98 : vector<16x1xf32>
    %100 = vector.extract_strided_slice %92 {offsets = [0, 5], sizes = [16, 1], strides = [1, 1]} : vector<16x32xf32> to vector<16x1xf32>
    %101 = arith.addf %99, %100 : vector<16x1xf32>
    %102 = vector.extract_strided_slice %92 {offsets = [0, 6], sizes = [16, 1], strides = [1, 1]} : vector<16x32xf32> to vector<16x1xf32>
    %103 = arith.addf %101, %102 : vector<16x1xf32>
    %104 = arith.mulf %43, %23 : vector<16x1xf32>
    %105 = arith.mulf %61, %25 : vector<16x1xf32>
    %106 = arith.addf %104, %105 : vector<16x1xf32>
    %107 = vector.extract_strided_slice %91 {offsets = [0, 0], sizes = [16, 1], strides = [1, 1]} : vector<16x32xf32> to vector<16x1xf32>
    %108 = arith.mulf %107, %1 : vector<16x1xf32>
    %109 = arith.mulf %108, %1 : vector<16x1xf32>
    %110 = arith.subf %106, %109 : vector<16x1xf32>
    %111 = arith.mulf %103, %1 : vector<16x1xf32>
    %112 = arith.subf %110, %111 : vector<16x1xf32>
    %113 = tpu.iota {dimensions = array<i32: 1>} : vector<16x32xi32>
    %c16_i32 = arith.constant 16 : i32
    %114 = vector.broadcast %c16_i32 : i32 to vector<16x32xi32>
    %115 = arith.cmpi eq, %113, %114 : vector<16x32xi32>
    %c17_i32 = arith.constant 17 : i32
    %116 = vector.broadcast %c17_i32 : i32 to vector<16x32xi32>
    %117 = arith.cmpi eq, %113, %116 : vector<16x32xi32>
    %118 = vector.shape_cast %112 : vector<16x1xf32> to vector<16x1xf32>
    %119 = vector.broadcast %118 : vector<16x1xf32> to vector<16x32xf32>
    %120 = arith.select %117, %119, %91 : vector<16x32xi1>, vector<16x32xf32>
    %121 = vector.shape_cast %64 : vector<16x1xf32> to vector<16x1xf32>
    %122 = vector.broadcast %121 : vector<16x1xf32> to vector<16x32xf32>
    %123 = arith.select %115, %122, %120 : vector<16x32xi1>, vector<16x32xf32>
    %c0_38 = arith.constant 0 : index
    %c0_39 = arith.constant 0 : index
    %124 = vector.load %arg8[%c0_38, %c0_39] : memref<16x32xf32, #tpu.memory_space<vmem>>, vector<16x32xf32>
    tpu.vector_store %arg8[%c0_38, %c0_39], %123 {strides = array<i32>} : memref<16x32xf32, #tpu.memory_space<vmem>>, vector<16x32xf32>,
    return
  }
  func.func @transform_0(%arg0: i32) -> (i32, i32) {
    %c0_i32 = arith.constant 0 : i32
    %c0_i32_0 = arith.constant 0 : i32
    return %arg0, %c0_i32 : i32, i32
  }
  func.func @transform_1(%arg0: i32) -> (i32, i32) {
    %c0_i32 = arith.constant 0 : i32
    %c0_i32_0 = arith.constant 0 : i32
    %c0_i32_1 = arith.constant 0 : i32
    return %c0_i32, %c0_i32_0 : i32, i32
  }
  func.func @transform_2(%arg0: i32) -> (i32, i32) {
    %c0_i32 = arith.constant 0 : i32
    %c0_i32_0 = arith.constant 0 : i32
    %c0_i32_1 = arith.constant 0 : i32
    return %c0_i32, %c0_i32_0 : i32, i32
  }
  func.func @transform_3(%arg0: i32) -> (i32, i32) {
    %c0_i32 = arith.constant 0 : i32
    %c0_i32_0 = arith.constant 0 : i32
    %c0_i32_1 = arith.constant 0 : i32
    return %c0_i32, %c0_i32_0 : i32, i32
  }
  func.func @transform_4(%arg0: i32) -> (i32, i32) {
    %c0_i32 = arith.constant 0 : i32
    %c0_i32_0 = arith.constant 0 : i32
    %c0_i32_1 = arith.constant 0 : i32
    return %c0_i32, %c0_i32_0 : i32, i32
  }
  func.func @transform_5(%arg0: i32) -> (i32, i32) {
    %c0_i32 = arith.constant 0 : i32
    %c0_i32_0 = arith.constant 0 : i32
    %c0_i32_1 = arith.constant 0 : i32
    return %c0_i32, %c0_i32_0 : i32, i32
  }
  func.func @transform_6(%arg0: i32) -> (i32, i32) {
    %c0_i32 = arith.constant 0 : i32
    %c0_i32_0 = arith.constant 0 : i32
    %c0_i32_1 = arith.constant 0 : i32
    return %c0_i32, %c0_i32_0 : i32, i32
  }
  func.func @transform_7(%arg0: i32) -> (i32, i32) {
    %c0_i32 = arith.constant 0 : i32
    %c0_i32_0 = arith.constant 0 : i32
    return %arg0, %c0_i32 : i32, i32
  }
}

</mosaic_0001>

<llo_original>
// kernel: particle_energy_predictor.1
$region0: #{particle_energy_predictor.1}
  #allocation0 [shape = 'u32[]', space=smem, size = 0x4, offset = 0x4, fixed_abs, tag = 'smem constant byte address 0x4 - core index']
  #allocation1 [shape = 'u32[144,128]{1,0:T(1,128)}', space=vmem, size = 0x12000, scoped, tag = 'internal scratch']
  %s0 = inlined_call_operand.vmem [shape: f32[16,32], index: 0, kind: input, shape index: {}]
  %s1 = inlined_call_operand.vmem [shape: f32[32,64], index: 1, kind: input, shape index: {}]
  %s2 = inlined_call_operand.vmem [shape: f32[64,64], index: 2, kind: input, shape index: {}]
  %s3 = inlined_call_operand.vmem [shape: f32[64,8], index: 3, kind: input, shape index: {}]
  %s4 = inlined_call_operand.vmem [shape: f32[64,32], index: 4, kind: input, shape index: {}]
  %s5 = inlined_call_operand.vmem [shape: f32[64,64], index: 5, kind: input, shape index: {}]
  %s6 = inlined_call_operand.vmem [shape: f32[8,64], index: 6, kind: input, shape index: {}]
  %s7 = inlined_call_operand.vmem [shape: f32[16,32], index: 7, kind: output, shape index: {}]
  %s8 = sld [smem:[#allocation0]]
  $region38: #{particle_energy_predictor.1} parent=0
    _
  %s10 = ssub.s32 1, %s8
  %s11 = scalar_select 0, %s10, %s8
  // Predicated region
  $region2: #{particle_energy_predictor.1} parent=0 // pred_check
    _
  $region3: #{particle_energy_predictor.1} parent=0 // pred_check_branch
    %13 = sbr.rel (0) target = $region5
  $region4: #{particle_energy_predictor.1} parent=0 // pred_region
    _
  $region5: #{particle_energy_predictor.1} parent=0 // pred_fallthru
    _
  // Predicated region
  $region6: #{particle_energy_predictor.1} parent=0 // pred_check
    _
  $region7: #{particle_energy_predictor.1} parent=0 // pred_check_branch
    %15 = sbr.rel (0) target = $region9
  $region8: #{particle_energy_predictor.1} parent=0 // pred_region
    _
  $region9: #{particle_energy_predictor.1} parent=0 // pred_fallthru
    _
  // Predicated region
  $region10: #{particle_energy_predictor.1} parent=0 // pred_check
    _
  $region11: #{particle_energy_predictor.1} parent=0 // pred_check_branch
    %17 = sbr.rel (0) target = $region13
  $region12: #{particle_energy_predictor.1} parent=0 // pred_region
    _
  $region13: #{particle_energy_predictor.1} parent=0 // pred_fallthru
    _
  // Predicated region
  $region14: #{particle_energy_predictor.1} parent=0 // pred_check
    _
  $region15: #{particle_energy_predictor.1} parent=0 // pred_check_branch
    %19 = sbr.rel (0) target = $region17
  $region16: #{particle_energy_predictor.1} parent=0 // pred_region
    _
  $region17: #{particle_energy_predictor.1} parent=0 // pred_fallthru
    _
  // Predicated region
  $region18: #{particle_energy_predictor.1} parent=0 // pred_check
    _
  $region19: #{particle_energy_predictor.1} parent=0 // pred_check_branch
    %21 = sbr.rel (0) target = $region21
  $region20: #{particle_energy_predictor.1} parent=0 // pred_region
    _
  $region21: #{particle_energy_predictor.1} parent=0 // pred_fallthru
    _
  // Predicated region
  $region22: #{particle_energy_predictor.1} parent=0 // pred_check
    _
  $region23: #{particle_energy_predictor.1} parent=0 // pred_check_branch
    %23 = sbr.rel (0) target = $region25
  $region24: #{particle_energy_predictor.1} parent=0 // pred_region
    _
  $region25: #{particle_energy_predictor.1} parent=0 // pred_fallthru
    _
  // Predicated region
  $region26: #{particle_energy_predictor.1} parent=0 // pred_check
    _
  $region27: #{particle_energy_predictor.1} parent=0 // pred_check_branch
    %25 = sbr.rel (0) target = $region29
  $region28: #{particle_energy_predictor.1} parent=0 // pred_region
    _
  $region29: #{particle_energy_predictor.1} parent=0 // pred_fallthru
    _
  %v26 = vld [vmem:[%s0] sm:$0xff]
  %v27 = vld [vmem:[%s0 + $0x8] sm:$0xff]
  %v28 = vld [vmem:[%s6] sm:$0x1]
  %v29 = vld [vmem:[%s6 + $0x1] sm:$0x1]
  %v30 = vld [vmem:[%s6 + $0x2] sm:$0x1]
  %v31 = vld [vmem:[%s6 + $0x3] sm:$0x1]
  %v32 = vld [vmem:[%s6 + $0x4] sm:$0x1]
  %v33 = vld [vmem:[%s1] sm:$0xff]
  %v34 = vld [vmem:[%s1 + $0x8] sm:$0xff]
  %v35 = vld [vmem:[%s1 + $0x10] sm:$0xff]
  %v36 = vld [vmem:[%s1 + $0x18] sm:$0xff]
  %v37 = vlaneseq
  %v38 = vshrl.u32 %v37, 7
  %v39 = vsub.s32 0, %v38
  %v40 = vrot.slane %v28, %v39
  %vm41 = vcmask 261120
  %v43 = vsel %vm41, %v26, 0
  %v46 = vsel %vm41, %v27, 0
  %48 = vmatprep.subr.mxu0 0.0
  %49 = vmatpush1.msra.mxu0 0.0
  %50 = vmatprep.subr.mxu0 0.0
  %51 = vmatpush1.msra.mxu0 0.0
  %52 = vmatprep.subr.mxu0 0.0
  %53 = vmatpush1.msra.mxu0 0.0
  %54 = vmatprep.subr.mxu0 0.0
  %55 = vmatpush1.msra.mxu0 0.0
  %56 = vmatprep.subr.mxu0 0.0
  %57 = vmatpush1.msra.mxu0 0.0
  %58 = vmatprep.subr.mxu0 0.0
  %59 = vmatpush1.msra.mxu0 0.0
  %60 = vmatprep.subr.mxu0 0.0
  %61 = vmatpush1.msra.mxu0 0.0
  %62 = vmatprep.subr.mxu0 0.0
  %63 = vmatpush1.msra.mxu0 0.0
  %64 = vmatprep.subr.mxu0 0.0
  %65 = vmatpush1.msra.mxu0 0.0
  %66 = vmatprep.subr.mxu0 0.0
  %67 = vmatpush1.msra.mxu0 0.0
  %68 = vmatprep.subr.mxu0 0.0
  %69 = vmatpush1.msra.mxu0 0.0
  %70 = vmatprep.subr.mxu0 0.0
  %71 = vmatpush1.msra.mxu0 0.0
  %72 = vmatprep.subr.mxu0 0.0
  %73 = vmatpush1.msra.mxu0 %v36
  %74 = vmatprep.subr.mxu0 0.0
  %75 = vmatpush1.msra.mxu0 %v35
  %76 = vmatprep.subr.mxu0 0.0
  %77 = vmatpush1.msra.mxu0 %v34
  %78 = vmatprep.subr.mxu0 0.0
  %79 = vmatpush1.msra.mxu0 %v33
  %80 = vmatprep.subr.mxu0 0.0
  %81 = vmatpush2.msra.mxu0 0.0
  %82 = vmatprep.subr.mxu0 0.0
  %83 = vmatpush2.msra.mxu0 0.0
  %84 = vmatprep.subr.mxu0 0.0
  %85 = vmatpush2.msra.mxu0 0.0
  %86 = vmatprep.subr.mxu0 0.0
  %87 = vmatpush2.msra.mxu0 0.0
  %88 = vmatprep.subr.mxu0 0.0
  %89 = vmatpush2.msra.mxu0 0.0
  %90 = vmatprep.subr.mxu0 0.0
  %91 = vmatpush2.msra.mxu0 0.0
  %92 = vmatprep.subr.mxu0 0.0
  %93 = vmatpush2.msra.mxu0 0.0
  %94 = vmatprep.subr.mxu0 0.0
  %95 = vmatpush2.msra.mxu0 0.0
  %96 = vmatprep.subr.mxu0 0.0
  %97 = vmatpush2.msra.mxu0 0.0
  %98 = vmatprep.subr.mxu0 0.0
  %99 = vmatpush2.msra.mxu0 0.0
  %100 = vmatprep.subr.mxu0 0.0
  %101 = vmatpush2.msra.mxu0 0.0
  %102 = vmatprep.subr.mxu0 0.0
  %103 = vmatpush2.msra.mxu0 0.0
  %104 = vmatprep.subr.mxu0 0.0
  %105 = vmatpush2.msra.mxu0 0.0
  %106 = vmatprep.subr.mxu0 0.0
  %107 = vmatpush2.msra.mxu0 0.0
  %108 = vmatprep.subr.mxu0 0.0
  %109 = vmatpush2.msra.mxu0 0.0
  %110 = vmatprep.subr.mxu0 0.0
  %111 = vmatpush2.msra.mxu0 0.0
  %112 = vmatprep.mubr.f32.mxu0 0.0
  %113 = vmatmul.mubr.f32.gmra.mxu0 %v43
  %v114 = vpop.f32.mrf.mxu0
  %v115 = vadd.f32 %v40, %v114
  %v116 = vpop.f32.mrf.mxu0
  %117 = vmatprep.mubr.f32.mxu0 0.0
  %118 = vmatmul.mubr.f32.gmra.mxu0 %v46
  %v119 = vpop.f32.mrf.mxu0
  %v120 = vadd.f32 %v40, %v119
  %v121 = vpop.f32.mrf.mxu0
  %122 = vdwg.mxu0
  %v123 = vtanh.pop %v115
  %v124 = vtanh.pop %v120
  %v125 = vld [vmem:[%s2] sm:$0xff]
  %v126 = vld [vmem:[%s2 + $0x8] sm:$0xff]
  %v127 = vld [vmem:[%s2 + $0x10] sm:$0xff]
  %v128 = vld [vmem:[%s2 + $0x18] sm:$0xff]
  %v129 = vld [vmem:[%s2 + $0x20] sm:$0xff]
  %v130 = vld [vmem:[%s2 + $0x28] sm:$0xff]
  %v131 = vld [vmem:[%s2 + $0x30] sm:$0xff]
  %v132 = vld [vmem:[%s2 + $0x38] sm:$0xff]
  %v133 = vlaneseq
  %v134 = vshrl.u32 %v133, 7
  %v135 = vsub.s32 0, %v134
  %v136 = vrot.slane %v29, %v135
  %vm137 = vcmask 523264
  %v139 = vsel %vm137, %v123, 0
  %v142 = vsel %vm137, %v124, 0
  %144 = vmatprep.subr.mxu0 0.0
  %145 = vmatpush1.msra.mxu0 0.0
  %146 = vmatprep.subr.mxu0 0.0
  %147 = vmatpush1.msra.mxu0 0.0
  %148 = vmatprep.subr.mxu0 0.0
  %149 = vmatpush1.msra.mxu0 0.0
  %150 = vmatprep.subr.mxu0 0.0
  %151 = vmatpush1.msra.mxu0 0.0
  %152 = vmatprep.subr.mxu0 0.0
  %153 = vmatpush1.msra.mxu0 0.0
  %154 = vmatprep.subr.mxu0 0.0
  %155 = vmatpush1.msra.mxu0 0.0
  %156 = vmatprep.subr.mxu0 0.0
  %157 = vmatpush1.msra.mxu0 0.0
  %158 = vmatprep.subr.mxu0 0.0
  %159 = vmatpush1.msra.mxu0 0.0
  %160 = vmatprep.subr.mxu0 0.0
  %161 = vmatpush1.msra.mxu0 %v132
  %162 = vmatprep.subr.mxu0 0.0
  %163 = vmatpush1.msra.mxu0 %v131
  %164 = vmatprep.subr.mxu0 0.0
  %165 = vmatpush1.msra.mxu0 %v130
  %166 = vmatprep.subr.mxu0 0.0
  %167 = vmatpush1.msra.mxu0 %v129
  %168 = vmatprep.subr.mxu0 0.0
  %169 = vmatpush1.msra.mxu0 %v128
  %170 = vmatprep.subr.mxu0 0.0
  %171 = vmatpush1.msra.mxu0 %v127
  %172 = vmatprep.subr.mxu0 0.0
  %173 = vmatpush1.msra.mxu0 %v126
  %174 = vmatprep.subr.mxu0 0.0
  %175 = vmatpush1.msra.mxu0 %v125
  %176 = vmatprep.subr.mxu0 0.0
  %177 = vmatpush2.msra.mxu0 0.0
  %178 = vmatprep.subr.mxu0 0.0
  %179 = vmatpush2.msra.mxu0 0.0
  %180 = vmatprep.subr.mxu0 0.0
  %181 = vmatpush2.msra.mxu0 0.0
  %182 = vmatprep.subr.mxu0 0.0
  %183 = vmatpush2.msra.mxu0 0.0
  %184 = vmatprep.subr.mxu0 0.0
  %185 = vmatpush2.msra.mxu0 0.0
  %186 = vmatprep.subr.mxu0 0.0
  %187 = vmatpush2.msra.mxu0 0.0
  %188 = vmatprep.subr.mxu0 0.0
  %189 = vmatpush2.msra.mxu0 0.0
  %190 = vmatprep.subr.mxu0 0.0
  %191 = vmatpush2.msra.mxu0 0.0
  %192 = vmatprep.subr.mxu0 0.0
  %193 = vmatpush2.msra.mxu0 0.0
  %194 = vmatprep.subr.mxu0 0.0
  %195 = vmatpush2.msra.mxu0 0.0
  %196 = vmatprep.subr.mxu0 0.0
  %197 = vmatpush2.msra.mxu0 0.0
  %198 = vmatprep.subr.mxu0 0.0
  %199 = vmatpush2.msra.mxu0 0.0
  %200 = vmatprep.subr.mxu0 0.0
  %201 = vmatpush2.msra.mxu0 0.0
  %202 = vmatprep.subr.mxu0 0.0
  %203 = vmatpush2.msra.mxu0 0.0
  %204 = vmatprep.subr.mxu0 0.0
  %205 = vmatpush2.msra.mxu0 0.0
  %206 = vmatprep.subr.mxu0 0.0
  %207 = vmatpush2.msra.mxu0 0.0
  %208 = vmatprep.mubr.f32.mxu0 0.0
  %209 = vmatmul.mubr.f32.gmra.mxu0 %v139
  %v210 = vpop.f32.mrf.mxu0
  %v211 = vadd.f32 %v136, %v210
  %v212 = vpop.f32.mrf.mxu0
  %213 = vmatprep.mubr.f32.mxu0 0.0
  %214 = vmatmul.mubr.f32.gmra.mxu0 %v142
  %v215 = vpop.f32.mrf.mxu0
  %v216 = vadd.f32 %v136, %v215
  %v217 = vpop.f32.mrf.mxu0
  %218 = vdwg.mxu0
  %v219 = vtanh.pop %v211
  %v220 = vtanh.pop %v216
  %v221 = vld [vmem:[%s3] sm:$0xff]
  %v222 = vld [vmem:[%s3 + $0x8] sm:$0xff]
  %v223 = vld [vmem:[%s3 + $0x10] sm:$0xff]
  %v224 = vld [vmem:[%s3 + $0x18] sm:$0xff]
  %v225 = vld [vmem:[%s3 + $0x20] sm:$0xff]
  %v226 = vld [vmem:[%s3 + $0x28] sm:$0xff]
  %v227 = vld [vmem:[%s3 + $0x30] sm:$0xff]
  %v228 = vld [vmem:[%s3 + $0x38] sm:$0xff]
  %v229 = vlaneseq
  %v230 = vshrl.u32 %v229, 7
  %v231 = vsub.s32 0, %v230
  %v232 = vrot.slane %v30, %v231
  %v234 = vsel %vm137, %v219, 0
  %v237 = vsel %vm137, %v220, 0
  %239 = vmatprep.subr.mxu0 0.0
  %240 = vmatpush1.msra.mxu0 0.0
  %241 = vmatprep.subr.mxu0 0.0
  %242 = vmatpush1.msra.mxu0 0.0
  %243 = vmatprep.subr.mxu0 0.0
  %244 = vmatpush1.msra.mxu0 0.0
  %245 = vmatprep.subr.mxu0 0.0
  %246 = vmatpush1.msra.mxu0 0.0
  %247 = vmatprep.subr.mxu0 0.0
  %248 = vmatpush1.msra.mxu0 0.0
  %249 = vmatprep.subr.mxu0 0.0
  %250 = vmatpush1.msra.mxu0 0.0
  %251 = vmatprep.subr.mxu0 0.0
  %252 = vmatpush1.msra.mxu0 0.0
  %253 = vmatprep.subr.mxu0 0.0
  %254 = vmatpush1.msra.mxu0 0.0
  %255 = vmatprep.subr.mxu0 0.0
  %256 = vmatpush1.msra.mxu0 %v228
  %257 = vmatprep.subr.mxu0 0.0
  %258 = vmatpush1.msra.mxu0 %v227
  %259 = vmatprep.subr.mxu0 0.0
  %260 = vmatpush1.msra.mxu0 %v226
  %261 = vmatprep.subr.mxu0 0.0
  %262 = vmatpush1.msra.mxu0 %v225
  %263 = vmatprep.subr.mxu0 0.0
  %264 = vmatpush1.msra.mxu0 %v224
  %265 = vmatprep.subr.mxu0 0.0
  %266 = vmatpush1.msra.mxu0 %v223
  %267 = vmatprep.subr.mxu0 0.0
  %268 = vmatpush1.msra.mxu0 %v222
  %269 = vmatprep.subr.mxu0 0.0
  %270 = vmatpush1.msra.mxu0 %v221
  %271 = vmatprep.subr.mxu0 0.0
  %272 = vmatpush2.msra.mxu0 0.0
  %273 = vmatprep.subr.mxu0 0.0
  %274 = vmatpush2.msra.mxu0 0.0
  %275 = vmatprep.subr.mxu0 0.0
  %276 = vmatpush2.msra.mxu0 0.0
  %277 = vmatprep.subr.mxu0 0.0
  %278 = vmatpush2.msra.mxu0 0.0
  %279 = vmatprep.subr.mxu0 0.0
  %280 = vmatpush2.msra.mxu0 0.0
  %281 = vmatprep.subr.mxu0 0.0
  %282 = vmatpush2.msra.mxu0 0.0
  %283 = vmatprep.subr.mxu0 0.0
  %284 = vmatpush2.msra.mxu0 0.0
  %285 = vmatprep.subr.mxu0 0.0
  %286 = vmatpush2.msra.mxu0 0.0
  %287 = vmatprep.subr.mxu0 0.0
  %288 = vmatpush2.msra.mxu0 0.0
  %289 = vmatprep.subr.mxu0 0.0
  %290 = vmatpush2.msra.mxu0 0.0
  %291 = vmatprep.subr.mxu0 0.0
  %292 = vmatpush2.msra.mxu0 0.0
  %293 = vmatprep.subr.mxu0 0.0
  %294 = vmatpush2.msra.mxu0 0.0
  %295 = vmatprep.subr.mxu0 0.0
  %296 = vmatpush2.msra.mxu0 0.0
  %297 = vmatprep.subr.mxu0 0.0
  %298 = vmatpush2.msra.mxu0 0.0
  %299 = vmatprep.subr.mxu0 0.0
  %300 = vmatpush2.msra.mxu0 0.0
  %301 = vmatprep.subr.mxu0 0.0
  %302 = vmatpush2.msra.mxu0 0.0
  %303 = vmatprep.mubr.f32.mxu0 0.0
  %304 = vmatmul.mubr.f32.gmra.mxu0 %v234
  %v305 = vpop.f32.mrf.mxu0
  %v306 = vadd.f32 %v232, %v305
  %v307 = vpop.f32.mrf.mxu0
  %308 = vmatprep.mubr.f32.mxu0 0.0
  %309 = vmatmul.mubr.f32.gmra.mxu0 %v237
  %v310 = vpop.f32.mrf.mxu0
  %v311 = vadd.f32 %v232, %v310
  %v312 = vpop.f32.mrf.mxu0
  %313 = vdwg.mxu0
  %v314 = vtanh.pop %v306
  %v315 = vtanh.pop %v311
  %v316 = vmul.f32 %v26, 0.20833333
  %v317 = vmul.f32 %v27, 0.20833333
  %v318 = vmul.f32 %v316, %v316
  %v319 = vmul.f32 %v317, %v317
  %v320 = vmul.f32 %v316, %v318
  %v321 = vmul.f32 %v317, %v319
  %v322 = vmul.f32 %v318, %v318
  %v323 = vmul.f32 %v319, %v319
  %v324 = vmul.f32 %v322, %v322
  %v325 = vmul.f32 %v323, %v323
  %v326 = vmul.f32 %v320, %v324
  %v327 = vmul.f32 %v321, %v325
  %v328 = vmul.f32 %v326, %v316
  %v329 = vmul.f32 %v327, %v317
  %v330 = vsub.f32 0.0, %v328
  %v331 = vsub.f32 0.0, %v329
  %v332 = vmul.f32 %v330, 1.442695
  %v333 = vpow.pop %v332
  %v334 = vmul.f32 %v331, 1.442695
  %v335 = vpow.pop %v334
  %v336 = vsub.f32 0.0, %v333
  %v337 = vsub.f32 0.0, %v335
  %v338 = vmul.f32 %v336, 2.5
  %v339 = vmul.f32 %v337, 2.5
  %v340 = vmul.f32 %v338, %v326
  %v341 = vmul.f32 %v339, %v327
  %vm342 = vcmp.le.f32.partialorder %v26, 4.8
  %vm343 = vcmp.le.f32.partialorder %v27, 4.8
  %v344 = vmul.f32 %v316, 3.1415927
  %v345 = vmul.f32 %v317, 3.1415927
  %v346 = vand.u32 2147483647, %v344
  %vm347 = vcmp.le.f32.partialorder %v346, 0.7853982
  %vm348 = vcmp.lt.s32.totalorder %v344, 0
  %v349 = vand.u32 %v344, 2139095040
  %v350 = vshrl.u32 %v349, 23
  %v351 = vsub.s32 %v350, 127
  %v352 = vand.u32 2147483647, %v344
  %v353 = vand.u32 %v352, 8388607
  %v354 = vor.u32 %v353, 8388608
  %v355 = vsub.s32 0, %v354
  %v356 = vadd.s32 %v351, 1
  %vm357 = vcmp.gt.s32.totalorder %v356, 0
  %v358 = vsel %vm357, %v356, 0
  %v359 = vshrl.u32 %v358, 5
  %v360 = vand.u32 %v358, 31
  %v361 = vsub.s32 32, %v360
  %v362 = vshrl.u32 683565275, %v361
  %v363 = vshll.u32 683565275, %v360
  %v364 = vshrl.u32 2475754826, %v361
  %v365 = vor.u32 %v363, %v364
  %v366 = vshll.u32 2475754826, %v360
  %v367 = vshrl.u32 2131351028, %v361
  %v368 = vor.u32 %v366, %v367
  %v369 = vshll.u32 2131351028, %v360
  %v370 = vshrl.u32 2102212464, %v361
  %v371 = vor.u32 %v369, %v370
  %v372 = vshll.u32 2102212464, %v360
  %v373 = vshrl.u32 920167782, %v361
  %v374 = vor.u32 %v372, %v373
  %v375 = vshll.u32 920167782, %v360
  %v376 = vshrl.u32 1326507024, %v361
  %v377 = vor.u32 %v375, %v376
  %vm378 = vcmp.lt.s32.totalorder %v359, 1
  %vm379 = vcmp.lt.s32.totalorder %v359, 2
  %vm380 = vcmp.lt.s32.totalorder %v359, 3
  %vm381 = vcmp.lt.s32.totalorder %v359, 4
  %v382 = vsel %vm378, %v362, %v365
  %v383 = vsel %vm381, %v371, 2102212464
  %v384 = vsel %vm380, %v368, %v383
  %v385 = vsel %vm379, %v382, %v384
  %v386 = vsel %vm378, %v365, %v368
  %v387 = vsel %vm381, %v374, 920167782
  %v388 = vsel %vm380, %v371, %v387
  %v389 = vsel %vm379, %v386, %v388
  %v390 = vsel %vm378, %v368, %v371
  %v391 = vsel %vm381, %v377, 1326507024
  %v392 = vsel %vm380, %v374, %v391
  %v393 = vsel %vm379, %v390, %v392
  %v394 = vshll.u32 %v354, 8
  %v395 = vmul.u32.u64.compose %v394, %v393
  %v396 = vextract.low.u32 %v395
  %v397 = vextract.high.u32 %v395
  %v398 = vmul.u32.u64.compose %v394, %v389
  %v399 = vextract.low.u32 %v398
  %v400 = vextract.high.u32 %v398
  %v401 = vmul.u32 %v394, %v385
  %v402 = vadd.s32 %v397, %v399
  %vm403 = vc.u32 %v397, %v399
  %v404 = vadd.s32 %v400, 1
  %v405 = vsel %vm403, %v404, %v400
  %v406 = vadd.s32 %v401, %v405
  %v407 = vadd.s32 %v406, 536870912
  %v408 = vshrl.u32 %v407, 30
  %v409 = vshll.u32 %v408, 30
  %v410 = vsub.s32 %v406, %v409
  %vm411 = vcmp.lt.s32.totalorder %v410, 0
  %v412 = vsub.s32 0, %v410
  %v413 = vsel %vm411, %v412, %v410
  %v414 = vclz %v413
  %v415 = vsub.s32 %v414, 2
  %vm416 = vcmp.gt.s32.totalorder 0, %v415
  %v417 = vsel %vm416, 0, %v415
  %v418 = vsub.s32 32, %v417
  %v419 = vshll.u32 %v410, %v417
  %v420 = vshrl.u32 %v402, %v418
  %v421 = vor.u32 %v419, %v420
  %v422 = vsub.s32 4294967266, %v417
  %v423 = vadd.s32 %v422, 127
  %v424 = vshll.u32 %v423, 23
  %v425 = vor.u32 4788187, %v424
  %v426 = vand.u32 2147483647, %v425
  %v428 = vcvt.s32.f32 %v421
  %v429 = vmul.f32 %v428, %v426
  %v430 = vxor.u32 %v429, 2147483648
  %v431 = vsel %vm348, %v430, %v429
  %v432 = vsub.s32 4, %v408
  %v433 = vsel %vm348, %v432, %v408
  %v434 = vsel %vm347, %v344, %v431
  %v435 = vsel %vm347, 0, %v433
  %v436 = vcosq.f32.pop %v434
  %v437 = vsinq.f32.pop %v434
  %vm438 = vweird.f32 %v344
  %v439 = vand.u32 %v435, 3
  %vm440 = vcmp.lt.s32.totalorder %v439, 2
  %vm441 = vcmp.eq.s32.totalorder %v439, 0
  %v442 = vxor.u32 %v437, 2147483648
  %v443 = vsel %vm441, %v436, %v442
  %vm444 = vcmp.eq.s32.totalorder %v439, 2
  %v445 = vxor.u32 %v436, 2147483648
  %v446 = vsel %vm444, %v445, %v437
  %v447 = vsel %vm440, %v443, %v446
  %v448 = vsel %vm438, nan, %v447
  %v449 = vand.u32 2147483647, %v345
  %vm450 = vcmp.le.f32.partialorder %v449, 0.7853982
  %vm451 = vcmp.lt.s32.totalorder %v345, 0
  %v452 = vand.u32 %v345, 2139095040
  %v453 = vshrl.u32 %v452, 23
  %v454 = vsub.s32 %v453, 127
  %v455 = vand.u32 2147483647, %v345
  %v456 = vand.u32 %v455, 8388607
  %v457 = vor.u32 %v456, 8388608
  %v458 = vsub.s32 0, %v457
  %v459 = vadd.s32 %v454, 1
  %vm460 = vcmp.gt.s32.totalorder %v459, 0
  %v461 = vsel %vm460, %v459, 0
  %v462 = vshrl.u32 %v461, 5
  %v463 = vand.u32 %v461, 31
  %v464 = vsub.s32 32, %v463
  %v465 = vshrl.u32 683565275, %v464
  %v466 = vshll.u32 683565275, %v463
  %v467 = vshrl.u32 2475754826, %v464
  %v468 = vor.u32 %v466, %v467
  %v469 = vshll.u32 2475754826, %v463
  %v470 = vshrl.u32 2131351028, %v464
  %v471 = vor.u32 %v469, %v470
  %v472 = vshll.u32 2131351028, %v463
  %v473 = vshrl.u32 2102212464, %v464
  %v474 = vor.u32 %v472, %v473
  %v475 = vshll.u32 2102212464, %v463
  %v476 = vshrl.u32 920167782, %v464
  %v477 = vor.u32 %v475, %v476
  %v478 = vshll.u32 920167782, %v463
  %v479 = vshrl.u32 1326507024, %v464
  %v480 = vor.u32 %v478, %v479
  %vm481 = vcmp.lt.s32.totalorder %v462, 1
  %vm482 = vcmp.lt.s32.totalorder %v462, 2
  %vm483 = vcmp.lt.s32.totalorder %v462, 3
  %vm484 = vcmp.lt.s32.totalorder %v462, 4
  %v485 = vsel %vm481, %v465, %v468
  %v486 = vsel %vm484, %v474, 2102212464
  %v487 = vsel %vm483, %v471, %v486
  %v488 = vsel %vm482, %v485, %v487
  %v489 = vsel %vm481, %v468, %v471
  %v490 = vsel %vm484, %v477, 920167782
  %v491 = vsel %vm483, %v474, %v490
  %v492 = vsel %vm482, %v489, %v491
  %v493 = vsel %vm481, %v471, %v474
  %v494 = vsel %vm484, %v480, 1326507024
  %v495 = vsel %vm483, %v477, %v494
  %v496 = vsel %vm482, %v493, %v495
  %v497 = vshll.u32 %v457, 8
  %v498 = vmul.u32.u64.compose %v497, %v496
  %v499 = vextract.low.u32 %v498
  %v500 = vextract.high.u32 %v498
  %v501 = vmul.u32.u64.compose %v497, %v492
  %v502 = vextract.low.u32 %v501
  %v503 = vextract.high.u32 %v501
  %v504 = vmul.u32 %v497, %v488
  %v505 = vadd.s32 %v500, %v502
  %vm506 = vc.u32 %v500, %v502
  %v507 = vadd.s32 %v503, 1
  %v508 = vsel %vm506, %v507, %v503
  %v509 = vadd.s32 %v504, %v508
  %v510 = vadd.s32 %v509, 536870912
  %v511 = vshrl.u32 %v510, 30
  %v512 = vshll.u32 %v511, 30
  %v513 = vsub.s32 %v509, %v512
  %vm514 = vcmp.lt.s32.totalorder %v513, 0
  %v515 = vsub.s32 0, %v513
  %v516 = vsel %vm514, %v515, %v513
  %v517 = vclz %v516
  %v518 = vsub.s32 %v517, 2
  %vm519 = vcmp.gt.s32.totalorder 0, %v518
  %v520 = vsel %vm519, 0, %v518
  %v521 = vsub.s32 32, %v520
  %v522 = vshll.u32 %v513, %v520
  %v523 = vshrl.u32 %v505, %v521
  %v524 = vor.u32 %v522, %v523
  %v525 = vsub.s32 4294967266, %v520
  %v526 = vadd.s32 %v525, 127
  %v527 = vshll.u32 %v526, 23
  %v528 = vor.u32 4788187, %v527
  %v529 = vand.u32 2147483647, %v528
  %v531 = vcvt.s32.f32 %v524
  %v532 = vmul.f32 %v531, %v529
  %v533 = vxor.u32 %v532, 2147483648
  %v534 = vsel %vm451, %v533, %v532
  %v535 = vsub.s32 4, %v511
  %v536 = vsel %vm451, %v535, %v511
  %v537 = vsel %vm450, %v345, %v534
  %v538 = vsel %vm450, 0, %v536
  %v539 = vcosq.f32.pop %v537
  %v540 = vsinq.f32.pop %v537
  %vm541 = vweird.f32 %v345
  %v542 = vand.u32 %v538, 3
  %vm543 = vcmp.lt.s32.totalorder %v542, 2
  %vm544 = vcmp.eq.s32.totalorder %v542, 0
  %v545 = vxor.u32 %v540, 2147483648
  %v546 = vsel %vm544, %v539, %v545
  %vm547 = vcmp.eq.s32.totalorder %v542, 2
  %v548 = vxor.u32 %v539, 2147483648
  %v549 = vsel %vm547, %v548, %v540
  %v550 = vsel %vm543, %v546, %v549
  %v551 = vsel %vm541, nan, %v550
  %v552 = vmul.f32 %v448, 0.5
  %v553 = vmul.f32 %v551, 0.5
  %v554 = vadd.f32 %v552, 0.5
  %v555 = vadd.f32 %v553, 0.5
  %v556 = vsel %vm342, %v554, 0.0
  %v557 = vsel %vm343, %v555, 0.0
  %v558 = vand.u32 2147483647, %v344
  %vm559 = vcmp.le.f32.partialorder %v558, 0.7853982
  %vm560 = vcmp.lt.s32.totalorder %v344, 0
  %v561 = vand.u32 %v344, 2139095040
  %v562 = vshrl.u32 %v561, 23
  %v563 = vsub.s32 %v562, 127
  %v564 = vand.u32 2147483647, %v344
  %v565 = vand.u32 %v564, 8388607
  %v566 = vor.u32 %v565, 8388608
  %v567 = vsub.s32 0, %v566
  %v568 = vadd.s32 %v563, 1
  %vm569 = vcmp.gt.s32.totalorder %v568, 0
  %v570 = vsel %vm569, %v568, 0
  %v571 = vshrl.u32 %v570, 5
  %v572 = vand.u32 %v570, 31
  %v573 = vsub.s32 32, %v572
  %v574 = vshrl.u32 683565275, %v573
  %v575 = vshll.u32 683565275, %v572
  %v576 = vshrl.u32 2475754826, %v573
  %v577 = vor.u32 %v575, %v576
  %v578 = vshll.u32 2475754826, %v572
  %v579 = vshrl.u32 2131351028, %v573
  %v580 = vor.u32 %v578, %v579
  %v581 = vshll.u32 2131351028, %v572
  %v582 = vshrl.u32 2102212464, %v573
  %v583 = vor.u32 %v581, %v582
  %v584 = vshll.u32 2102212464, %v572
  %v585 = vshrl.u32 920167782, %v573
  %v586 = vor.u32 %v584, %v585
  %v587 = vshll.u32 920167782, %v572
  %v588 = vshrl.u32 1326507024, %v573
  %v589 = vor.u32 %v587, %v588
  %vm590 = vcmp.lt.s32.totalorder %v571, 1
  %vm591 = vcmp.lt.s32.totalorder %v571, 2
  %vm592 = vcmp.lt.s32.totalorder %v571, 3
  %vm593 = vcmp.lt.s32.totalorder %v571, 4
  %v594 = vsel %vm590, %v574, %v577
  %v595 = vsel %vm593, %v583, 2102212464
  %v596 = vsel %vm592, %v580, %v595
  %v597 = vsel %vm591, %v594, %v596
  %v598 = vsel %vm590, %v577, %v580
  %v599 = vsel %vm593, %v586, 920167782
  %v600 = vsel %vm592, %v583, %v599
  %v601 = vsel %vm591, %v598, %v600
  %v602 = vsel %vm590, %v580, %v583
  %v603 = vsel %vm593, %v589, 1326507024
  %v604 = vsel %vm592, %v586, %v603
  %v605 = vsel %vm591, %v602, %v604
  %v606 = vshll.u32 %v566, 8
  %v607 = vmul.u32.u64.compose %v606, %v605
  %v608 = vextract.low.u32 %v607
  %v609 = vextract.high.u32 %v607
  %v610 = vmul.u32.u64.compose %v606, %v601
  %v611 = vextract.low.u32 %v610
  %v612 = vextract.high.u32 %v610
  %v613 = vmul.u32 %v606, %v597
  %v614 = vadd.s32 %v609, %v611
  %vm615 = vc.u32 %v609, %v611
  %v616 = vadd.s32 %v612, 1
  %v617 = vsel %vm615, %v616, %v612
  %v618 = vadd.s32 %v613, %v617
  %v619 = vadd.s32 %v618, 536870912
  %v620 = vshrl.u32 %v619, 30
  %v621 = vshll.u32 %v620, 30
  %v622 = vsub.s32 %v618, %v621
  %vm623 = vcmp.lt.s32.totalorder %v622, 0
  %v624 = vsub.s32 0, %v622
  %v625 = vsel %vm623, %v624, %v622
  %v626 = vclz %v625
  %v627 = vsub.s32 %v626, 2
  %vm628 = vcmp.gt.s32.totalorder 0, %v627
  %v629 = vsel %vm628, 0, %v627
  %v630 = vsub.s32 32, %v629
  %v631 = vshll.u32 %v622, %v629
  %v632 = vshrl.u32 %v614, %v630
  %v633 = vor.u32 %v631, %v632
  %v634 = vsub.s32 4294967266, %v629
  %v635 = vadd.s32 %v634, 127
  %v636 = vshll.u32 %v635, 23
  %v637 = vor.u32 4788187, %v636
  %v638 = vand.u32 2147483647, %v637
  %v640 = vcvt.s32.f32 %v633
  %v641 = vmul.f32 %v640, %v638
  %v642 = vxor.u32 %v641, 2147483648
  %v643 = vsel %vm560, %v642, %v641
  %v644 = vsub.s32 4, %v620
  %v645 = vsel %vm560, %v644, %v620
  %v646 = vsel %vm559, %v344, %v643
  %v647 = vsel %vm559, 0, %v645
  %v648 = vcosq.f32.pop %v646
  %v649 = vsinq.f32.pop %v646
  %vm650 = vweird.f32 %v344
  %v651 = vadd.s32 %v647, 3
  %v652 = vand.u32 %v651, 3
  %vm653 = vcmp.lt.s32.totalorder %v652, 2
  %vm654 = vcmp.eq.s32.totalorder %v652, 0
  %v655 = vxor.u32 %v649, 2147483648
  %v656 = vsel %vm654, %v648, %v655
  %vm657 = vcmp.eq.s32.totalorder %v652, 2
  %v658 = vxor.u32 %v648, 2147483648
  %v659 = vsel %vm657, %v658, %v649
  %v660 = vsel %vm653, %v656, %v659
  %v661 = vsel %vm650, nan, %v660
  %v662 = vand.u32 2147483647, %v345
  %vm663 = vcmp.le.f32.partialorder %v662, 0.7853982
  %vm664 = vcmp.lt.s32.totalorder %v345, 0
  %v665 = vand.u32 %v345, 2139095040
  %v666 = vshrl.u32 %v665, 23
  %v667 = vsub.s32 %v666, 127
  %v668 = vand.u32 2147483647, %v345
  %v669 = vand.u32 %v668, 8388607
  %v670 = vor.u32 %v669, 8388608
  %v671 = vsub.s32 0, %v670
  %v672 = vadd.s32 %v667, 1
  %vm673 = vcmp.gt.s32.totalorder %v672, 0
  %v674 = vsel %vm673, %v672, 0
  %v675 = vshrl.u32 %v674, 5
  %v676 = vand.u32 %v674, 31
  %v677 = vsub.s32 32, %v676
  %v678 = vshrl.u32 683565275, %v677
  %v679 = vshll.u32 683565275, %v676
  %v680 = vshrl.u32 2475754826, %v677
  %v681 = vor.u32 %v679, %v680
  %v682 = vshll.u32 2475754826, %v676
  %v683 = vshrl.u32 2131351028, %v677
  %v684 = vor.u32 %v682, %v683
  %v685 = vshll.u32 2131351028, %v676
  %v686 = vshrl.u32 2102212464, %v677
  %v687 = vor.u32 %v685, %v686
  %v688 = vshll.u32 2102212464, %v676
  %v689 = vshrl.u32 920167782, %v677
  %v690 = vor.u32 %v688, %v689
  %v691 = vshll.u32 920167782, %v676
  %v692 = vshrl.u32 1326507024, %v677
  %v693 = vor.u32 %v691, %v692
  %vm694 = vcmp.lt.s32.totalorder %v675, 1
  %vm695 = vcmp.lt.s32.totalorder %v675, 2
  %vm696 = vcmp.lt.s32.totalorder %v675, 3
  %vm697 = vcmp.lt.s32.totalorder %v675, 4
  %v698 = vsel %vm694, %v678, %v681
  %v699 = vsel %vm697, %v687, 2102212464
  %v700 = vsel %vm696, %v684, %v699
  %v701 = vsel %vm695, %v698, %v700
  %v702 = vsel %vm694, %v681, %v684
  %v703 = vsel %vm697, %v690, 920167782
  %v704 = vsel %vm696, %v687, %v703
  %v705 = vsel %vm695, %v702, %v704
  %v706 = vsel %vm694, %v684, %v687
  %v707 = vsel %vm697, %v693, 1326507024
  %v708 = vsel %vm696, %v690, %v707
  %v709 = vsel %vm695, %v706, %v708
  %v710 = vshll.u32 %v670, 8
  %v711 = vmul.u32.u64.compose %v710, %v709
  %v712 = vextract.low.u32 %v711
  %v713 = vextract.high.u32 %v711
  %v714 = vmul.u32.u64.compose %v710, %v705
  %v715 = vextract.low.u32 %v714
  %v716 = vextract.high.u32 %v714
  %v717 = vmul.u32 %v710, %v701
  %v718 = vadd.s32 %v713, %v715
  %vm719 = vc.u32 %v713, %v715
  %v720 = vadd.s32 %v716, 1
  %v721 = vsel %vm719, %v720, %v716
  %v722 = vadd.s32 %v717, %v721
  %v723 = vadd.s32 %v722, 536870912
  %v724 = vshrl.u32 %v723, 30
  %v725 = vshll.u32 %v724, 30
  %v726 = vsub.s32 %v722, %v725
  %vm727 = vcmp.lt.s32.totalorder %v726, 0
  %v728 = vsub.s32 0, %v726
  %v729 = vsel %vm727, %v728, %v726
  %v730 = vclz %v729
  %v731 = vsub.s32 %v730, 2
  %vm732 = vcmp.gt.s32.totalorder 0, %v731
  %v733 = vsel %vm732, 0, %v731
  %v734 = vsub.s32 32, %v733
  %v735 = vshll.u32 %v726, %v733
  %v736 = vshrl.u32 %v718, %v734
  %v737 = vor.u32 %v735, %v736
  %v738 = vsub.s32 4294967266, %v733
  %v739 = vadd.s32 %v738, 127
  %v740 = vshll.u32 %v739, 23
  %v741 = vor.u32 4788187, %v740
  %v742 = vand.u32 2147483647, %v741
  %v744 = vcvt.s32.f32 %v737
  %v745 = vmul.f32 %v744, %v742
  %v746 = vxor.u32 %v745, 2147483648
  %v747 = vsel %vm664, %v746, %v745
  %v748 = vsub.s32 4, %v724
  %v749 = vsel %vm664, %v748, %v724
  %v750 = vsel %vm663, %v345, %v747
  %v751 = vsel %vm663, 0, %v749
  %v752 = vcosq.f32.pop %v750
  %v753 = vsinq.f32.pop %v750
  %vm754 = vweird.f32 %v345
  %v755 = vadd.s32 %v751, 3
  %v756 = vand.u32 %v755, 3
  %vm757 = vcmp.lt.s32.totalorder %v756, 2
  %vm758 = vcmp.eq.s32.totalorder %v756, 0
  %v759 = vxor.u32 %v753, 2147483648
  %v760 = vsel %vm758, %v752, %v759
  %vm761 = vcmp.eq.s32.totalorder %v756, 2
  %v762 = vxor.u32 %v752, 2147483648
  %v763 = vsel %vm761, %v762, %v753
  %v764 = vsel %vm757, %v760, %v763
  %v765 = vsel %vm754, nan, %v764
  %v766 = vmul.f32 %v661, -0.32724923
  %v767 = vmul.f32 %v765, -0.32724923
  %v768 = vsel %vm342, %v766, 0.0
  %v769 = vsel %vm343, %v767, 0.0
  %772 = vrot.lane.b32.xlu0 %v314, 16
  %v773 = vpop.permute.xlu0 %772
  %774 = vrot.lane.b32.xlu0 %v315, 16
  %v775 = vpop.permute.xlu0 %774
  %v778 = vmul.f32 %v333, %v773
  %v779 = vmul.f32 %v335, %v775
  %780 = vrot.lane.b32.xlu0 %v314, 15
  %v781 = vpop.permute.xlu0 %780
  %782 = vrot.lane.b32.xlu0 %v315, 15
  %v783 = vpop.permute.xlu0 %782
  %v786 = vmul.f32 %v556, %v781
  %v787 = vmul.f32 %v557, %v783
  %v788 = vadd.f32 %v778, %v786
  %v789 = vadd.f32 %v779, %v787
  %v790 = vmul.f32 %v314, %v314
  %v791 = vmul.f32 %v315, %v315
  %v792 = vsub.f32 1.0, %v790
  %v793 = vsub.f32 1.0, %v791
  %796 = vrot.lane.b32.xlu0 %v792, 16
  %v797 = vpop.permute.xlu0 %796
  %798 = vrot.lane.b32.xlu0 %v793, 16
  %v799 = vpop.permute.xlu0 %798
  %v802 = vmul.f32 %v333, %v797
  %v803 = vmul.f32 %v335, %v799
  %804 = vrot.lane.b32.xlu0 %v792, 15
  %v805 = vpop.permute.xlu0 %804
  %806 = vrot.lane.b32.xlu0 %v793, 15
  %v807 = vpop.permute.xlu0 %806
  %v810 = vmul.f32 %v556, %v805
  %v811 = vmul.f32 %v557, %v807
  %813 = vset.pattern.permute.xlu0 16
  %814 = vperm.xlu0 %813, %v802
  %v815 = vpop.permute.xlu0 %814
  %818 = vset.pattern.permute.xlu0 16
  %819 = vperm.xlu0 %818, %v803
  %v820 = vpop.permute.xlu0 %819
  %v822 = vlaneseq
  %v823 = vshrl.u32 %v822, 7
  %v824 = vsub.s32 0, %v823
  %v825 = vrot.slane %v31, %v824
  %v826 = vmul.f32 %v815, %v825
  %v827 = vmul.f32 %v820, %v825
  %829 = vset.pattern.permute.xlu0 16
  %830 = vperm.xlu0 %829, %v810
  %v831 = vpop.permute.xlu0 %830
  %834 = vset.pattern.permute.xlu0 16
  %835 = vperm.xlu0 %834, %v811
  %v836 = vpop.permute.xlu0 %835
  %v838 = vlaneseq
  %v839 = vshrl.u32 %v838, 7
  %v840 = vsub.s32 0, %v839
  %v841 = vrot.slane %v32, %v840
  %v842 = vmul.f32 %v831, %v841
  %v843 = vmul.f32 %v836, %v841
  %v844 = vadd.f32 %v826, %v842
  %v845 = vadd.f32 %v827, %v843
  %v846 = vmul.f32 %v219, %v219
  %v847 = vmul.f32 %v220, %v220
  %v848 = vsub.f32 1.0, %v846
  %v849 = vsub.f32 1.0, %v847
  %v850 = vmul.f32 %v844, %v848
  %v851 = vmul.f32 %v845, %v849
  %v852 = vld [vmem:[%s5] sm:$0xff]
  %v853 = vld [vmem:[%s5 + $0x8] sm:$0xff]
  %v854 = vld [vmem:[%s5 + $0x10] sm:$0xff]
  %v855 = vld [vmem:[%s5 + $0x18] sm:$0xff]
  %v856 = vld [vmem:[%s5 + $0x20] sm:$0xff]
  %v857 = vld [vmem:[%s5 + $0x28] sm:$0xff]
  %v858 = vld [vmem:[%s5 + $0x30] sm:$0xff]
  %v859 = vld [vmem:[%s5 + $0x38] sm:$0xff]
  %v861 = vsel %vm137, %v850, 0
  %v864 = vsel %vm137, %v851, 0
  %866 = vmatprep.subr.mxu0 0.0
  %867 = vmatpush1.msra.mxu0 0.0
  %868 = vmatprep.subr.mxu0 0.0
  %869 = vmatpush1.msra.mxu0 0.0
  %870 = vmatprep.subr.mxu0 0.0
  %871 = vmatpush1.msra.mxu0 0.0
  %872 = vmatprep.subr.mxu0 0.0
  %873 = vmatpush1.msra.mxu0 0.0
  %874 = vmatprep.subr.mxu0 0.0
  %875 = vmatpush1.msra.mxu0 0.0
  %876 = vmatprep.subr.mxu0 0.0
  %877 = vmatpush1.msra.mxu0 0.0
  %878 = vmatprep.subr.mxu0 0.0
  %879 = vmatpush1.msra.mxu0 0.0
  %880 = vmatprep.subr.mxu0 0.0
  %881 = vmatpush1.msra.mxu0 0.0
  %882 = vmatprep.subr.mxu0 0.0
  %883 = vmatpush1.msra.mxu0 %v859
  %884 = vmatprep.subr.mxu0 0.0
  %885 = vmatpush1.msra.mxu0 %v858
  %886 = vmatprep.subr.mxu0 0.0
  %887 = vmatpush1.msra.mxu0 %v857
  %888 = vmatprep.subr.mxu0 0.0
  %889 = vmatpush1.msra.mxu0 %v856
  %890 = vmatprep.subr.mxu0 0.0
  %891 = vmatpush1.msra.mxu0 %v855
  %892 = vmatprep.subr.mxu0 0.0
  %893 = vmatpush1.msra.mxu0 %v854
  %894 = vmatprep.subr.mxu0 0.0
  %895 = vmatpush1.msra.mxu0 %v853
  %896 = vmatprep.subr.mxu0 0.0
  %897 = vmatpush1.msra.mxu0 %v852
  %898 = vmatprep.subr.mxu0 0.0
  %899 = vmatpush2.msra.mxu0 0.0
  %900 = vmatprep.subr.mxu0 0.0
  %901 = vmatpush2.msra.mxu0 0.0
  %902 = vmatprep.subr.mxu0 0.0
  %903 = vmatpush2.msra.mxu0 0.0
  %904 = vmatprep.subr.mxu0 0.0
  %905 = vmatpush2.msra.mxu0 0.0
  %906 = vmatprep.subr.mxu0 0.0
  %907 = vmatpush2.msra.mxu0 0.0
  %908 = vmatprep.subr.mxu0 0.0
  %909 = vmatpush2.msra.mxu0 0.0
  %910 = vmatprep.subr.mxu0 0.0
  %911 = vmatpush2.msra.mxu0 0.0
  %912 = vmatprep.subr.mxu0 0.0
  %913 = vmatpush2.msra.mxu0 0.0
  %914 = vmatprep.subr.mxu0 0.0
  %915 = vmatpush2.msra.mxu0 0.0
  %916 = vmatprep.subr.mxu0 0.0
  %917 = vmatpush2.msra.mxu0 0.0
  %918 = vmatprep.subr.mxu0 0.0
  %919 = vmatpush2.msra.mxu0 0.0
  %920 = vmatprep.subr.mxu0 0.0
  %921 = vmatpush2.msra.mxu0 0.0
  %922 = vmatprep.subr.mxu0 0.0
  %923 = vmatpush2.msra.mxu0 0.0
  %924 = vmatprep.subr.mxu0 0.0
  %925 = vmatpush2.msra.mxu0 0.0
  %926 = vmatprep.subr.mxu0 0.0
  %927 = vmatpush2.msra.mxu0 0.0
  %928 = vmatprep.subr.mxu0 0.0
  %929 = vmatpush2.msra.mxu0 0.0
  %930 = vmatprep.mubr.f32.mxu0 0.0
  %931 = vmatmul.mubr.f32.gmra.mxu0 %v861
  %v932 = vpop.f32.mrf.mxu0
  %v933 = vadd.f32 0.0, %v932
  %v934 = vpop.f32.mrf.mxu0
  %935 = vmatprep.mubr.f32.mxu0 0.0
  %936 = vmatmul.mubr.f32.gmra.mxu0 %v864
  %v937 = vpop.f32.mrf.mxu0
  %v938 = vadd.f32 0.0, %v937
  %v939 = vpop.f32.mrf.mxu0
  %940 = vdwg.mxu0
  %v941 = vmul.f32 %v123, %v123
  %v942 = vmul.f32 %v124, %v124
  %v943 = vsub.f32 1.0, %v941
  %v944 = vsub.f32 1.0, %v942
  %v945 = vmul.f32 %v933, %v943
  %v946 = vmul.f32 %v938, %v944
  %v947 = vld [vmem:[%s4] sm:$0xff]
  %v948 = vld [vmem:[%s4 + $0x8] sm:$0xff]
  %v949 = vld [vmem:[%s4 + $0x10] sm:$0xff]
  %v950 = vld [vmem:[%s4 + $0x18] sm:$0xff]
  %v951 = vld [vmem:[%s4 + $0x20] sm:$0xff]
  %v952 = vld [vmem:[%s4 + $0x28] sm:$0xff]
  %v953 = vld [vmem:[%s4 + $0x30] sm:$0xff]
  %v954 = vld [vmem:[%s4 + $0x38] sm:$0xff]
  %v956 = vsel %vm137, %v945, 0
  %v959 = vsel %vm137, %v946, 0
  %961 = vmatprep.subr.mxu0 0.0
  %962 = vmatpush1.msra.mxu0 0.0
  %963 = vmatprep.subr.mxu0 0.0
  %964 = vmatpush1.msra.mxu0 0.0
  %965 = vmatprep.subr.mxu0 0.0
  %966 = vmatpush1.msra.mxu0 0.0
  %967 = vmatprep.subr.mxu0 0.0
  %968 = vmatpush1.msra.mxu0 0.0
  %969 = vmatprep.subr.mxu0 0.0
  %970 = vmatpush1.msra.mxu0 0.0
  %971 = vmatprep.subr.mxu0 0.0
  %972 = vmatpush1.msra.mxu0 0.0
  %973 = vmatprep.subr.mxu0 0.0
  %974 = vmatpush1.msra.mxu0 0.0
  %975 = vmatprep.subr.mxu0 0.0
  %976 = vmatpush1.msra.mxu0 0.0
  %977 = vmatprep.subr.mxu0 0.0
  %978 = vmatpush1.msra.mxu0 %v954
  %979 = vmatprep.subr.mxu0 0.0
  %980 = vmatpush1.msra.mxu0 %v953
  %981 = vmatprep.subr.mxu0 0.0
  %982 = vmatpush1.msra.mxu0 %v952
  %983 = vmatprep.subr.mxu0 0.0
  %984 = vmatpush1.msra.mxu0 %v951
  %985 = vmatprep.subr.mxu0 0.0
  %986 = vmatpush1.msra.mxu0 %v950
  %987 = vmatprep.subr.mxu0 0.0
  %988 = vmatpush1.msra.mxu0 %v949
  %989 = vmatprep.subr.mxu0 0.0
  %990 = vmatpush1.msra.mxu0 %v948
  %991 = vmatprep.subr.mxu0 0.0
  %992 = vmatpush1.msra.mxu0 %v947
  %993 = vmatprep.subr.mxu0 0.0
  %994 = vmatpush2.msra.mxu0 0.0
  %995 = vmatprep.subr.mxu0 0.0
  %996 = vmatpush2.msra.mxu0 0.0
  %997 = vmatprep.subr.mxu0 0.0
  %998 = vmatpush2.msra.mxu0 0.0
  %999 = vmatprep.subr.mxu0 0.0
  %1000 = vmatpush2.msra.mxu0 0.0
  %1001 = vmatprep.subr.mxu0 0.0
  %1002 = vmatpush2.msra.mxu0 0.0
  %1003 = vmatprep.subr.mxu0 0.0
  %1004 = vmatpush2.msra.mxu0 0.0
  %1005 = vmatprep.subr.mxu0 0.0
  %1006 = vmatpush2.msra.mxu0 0.0
  %1007 = vmatprep.subr.mxu0 0.0
  %1008 = vmatpush2.msra.mxu0 0.0
  %1009 = vmatprep.subr.mxu0 0.0
  %1010 = vmatpush2.msra.mxu0 0.0
  %1011 = vmatprep.subr.mxu0 0.0
  %1012 = vmatpush2.msra.mxu0 0.0
  %1013 = vmatprep.subr.mxu0 0.0
  %1014 = vmatpush2.msra.mxu0 0.0
  %1015 = vmatprep.subr.mxu0 0.0
  %1016 = vmatpush2.msra.mxu0 0.0
  %1017 = vmatprep.subr.mxu0 0.0
  %1018 = vmatpush2.msra.mxu0 0.0
  %1019 = vmatprep.subr.mxu0 0.0
  %1020 = vmatpush2.msra.mxu0 0.0
  %1021 = vmatprep.subr.mxu0 0.0
  %1022 = vmatpush2.msra.mxu0 0.0
  %1023 = vmatprep.subr.mxu0 0.0
  %1024 = vmatpush2.msra.mxu0 0.0
  %1025 = vmatprep.mubr.f32.mxu0 0.0
  %1026 = vmatmul.mubr.f32.gmra.mxu0 %v956
  %v1027 = vpop.f32.mrf.mxu0
  %v1028 = vadd.f32 0.0, %v1027
  %v1029 = vpop.f32.mrf.mxu0
  %1030 = vmatprep.mubr.f32.mxu0 0.0
  %1031 = vmatmul.mubr.f32.gmra.mxu0 %v959
  %v1032 = vpop.f32.mrf.mxu0
  %v1033 = vadd.f32 0.0, %v1032
  %v1034 = vpop.f32.mrf.mxu0
  %1035 = vdwg.mxu0
  %v1036 = vmul.f32 %v1028, %v26
  %v1037 = vmul.f32 %v1033, %v27
  %1040 = vrot.lane.b32.xlu0 %v1036, 127
  %v1041 = vpop.permute.xlu0 %1040
  %1042 = vrot.lane.b32.xlu0 %v1037, 127
  %v1043 = vpop.permute.xlu0 %1042
  %v1046 = vadd.f32 %v1036, %v1041
  %v1047 = vadd.f32 %v1037, %v1043
  %1048 = vrot.lane.b32.xlu0 %v1036, 126
  %v1049 = vpop.permute.xlu0 %1048
  %1050 = vrot.lane.b32.xlu0 %v1037, 126
  %v1051 = vpop.permute.xlu0 %1050
  %v1054 = vadd.f32 %v1046, %v1049
  %v1055 = vadd.f32 %v1047, %v1051
  %1056 = vrot.lane.b32.xlu0 %v1036, 125
  %v1057 = vpop.permute.xlu0 %1056
  %1058 = vrot.lane.b32.xlu0 %v1037, 125
  %v1059 = vpop.permute.xlu0 %1058
  %v1062 = vadd.f32 %v1054, %v1057
  %v1063 = vadd.f32 %v1055, %v1059
  %1064 = vrot.lane.b32.xlu0 %v1036, 124
  %v1065 = vpop.permute.xlu0 %1064
  %1066 = vrot.lane.b32.xlu0 %v1037, 124
  %v1067 = vpop.permute.xlu0 %1066
  %v1070 = vadd.f32 %v1062, %v1065
  %v1071 = vadd.f32 %v1063, %v1067
  %1072 = vrot.lane.b32.xlu0 %v1036, 123
  %v1073 = vpop.permute.xlu0 %1072
  %1074 = vrot.lane.b32.xlu0 %v1037, 123
  %v1075 = vpop.permute.xlu0 %1074
  %v1078 = vadd.f32 %v1070, %v1073
  %v1079 = vadd.f32 %v1071, %v1075
  %v1080 = vmul.f32 %v340, %v773
  %v1081 = vmul.f32 %v341, %v775
  %v1082 = vmul.f32 %v768, %v781
  %v1083 = vmul.f32 %v769, %v783
  %v1084 = vadd.f32 %v1080, %v1082
  %v1085 = vadd.f32 %v1081, %v1083
  %v1086 = vmul.f32 %v1036, %v26
  %v1087 = vmul.f32 %v1037, %v27
  %1090 = vrot.lane.b32.xlu0 %v1086, 16
  %v1091 = vpop.permute.xlu0 %1090
  %1092 = vrot.lane.b32.xlu0 %v1087, 16
  %v1093 = vpop.permute.xlu0 %1092
  %v1096 = vsub.f32 %v1084, %v1091
  %v1097 = vsub.f32 %v1085, %v1093
  %1098 = vrot.lane.b32.xlu0 %v26, 1
  %v1099 = vpop.permute.xlu0 %1098
  %1100 = vrot.lane.b32.xlu0 %v27, 1
  %v1101 = vpop.permute.xlu0 %1100
  %v1104 = vmul.f32 %v1078, %v1099
  %v1105 = vmul.f32 %v1079, %v1101
  %1108 = vrot.lane.b32.xlu0 %v1104, 15
  %v1109 = vpop.permute.xlu0 %1108
  %1110 = vrot.lane.b32.xlu0 %v1105, 15
  %v1111 = vpop.permute.xlu0 %1110
  %v1114 = vsub.f32 %v1096, %v1109
  %v1115 = vsub.f32 %v1097, %v1111
  %v1116 = vlaneseq
  %v1117 = vand.u32 %v1116, 127
  %vm1118 = vcmp.eq.s32.totalorder %v1117, 16
  %vm1119 = vcmp.eq.s32.totalorder %v1117, 17
  %1121 = vset.pattern.permute.xlu0 16
  %1122 = vperm.xlu0 %1121, %v1114
  %v1123 = vpop.permute.xlu0 %1122
  %1126 = vset.pattern.permute.xlu0 16
  %1127 = vperm.xlu0 %1126, %v1115
  %v1128 = vpop.permute.xlu0 %1127
  %v1130 = vsel %vm1119, %v1123, %v1028
  %v1131 = vsel %vm1119, %v1128, %v1033
  %1133 = vset.pattern.permute.xlu0 16
  %1134 = vperm.xlu0 %1133, %v788
  %v1135 = vpop.permute.xlu0 %1134
  %1138 = vset.pattern.permute.xlu0 16
  %1139 = vperm.xlu0 %1138, %v789
  %v1140 = vpop.permute.xlu0 %1139
  %v1142 = vsel %vm1118, %v1135, %v1130
  %v1143 = vsel %vm1118, %v1140, %v1131
  %1144 = vst.msk [vmem:[%s7] sm:$0xff] %vm41, %v1142
  %1145 = vst.msk [vmem:[%s7 + $0x8] sm:$0xff] %vm41, %v1143
  // Predicated region
  $region30: #{particle_energy_predictor.1} parent=0 // pred_check
    _
  $region31: #{particle_energy_predictor.1} parent=0 // pred_check_branch
    %1147 = sbr.rel (0) target = $region33
  $region32: #{particle_energy_predictor.1} parent=0 // pred_region
    _
  $region33: #{particle_energy_predictor.1} parent=0 // pred_fallthru
    _
  // Predicated region
  $region34: #{particle_energy_predictor.1} parent=0 // pred_check
    _
  $region35: #{particle_energy_predictor.1} parent=0 // pred_check_branch
    %1149 = sbr.rel (0) target = $region37
  $region36: #{particle_energy_predictor.1} parent=0 // pred_region
    _
  $region37: #{particle_energy_predictor.1} parent=0 // pred_fallthru
    _

</llo_original>
